<compile_context>
chip_gen: v5e
topology: v5e:2x2
jax: 0.10.0
libtpu: 0.0.40
codegen_flags: <defaults>
</compile_context>

<pallas_src>
import functools

import jax
import jax.numpy as jnp
from jax import lax
from jax.experimental import pallas as pl
from jax.experimental.pallas import tpu as pltpu

NEG_SLOPE = 0.2
IN_EPS = 1e-5
VMEM_LIMIT_BYTES = 32 * 1024 * 1024  # explicit; safe on v5e/v6e/v7x


def _round_up(x, m):
    return ((x + m - 1) // m) * m


def _choose_tile(dim, max_tile, align):
    """Pick a tile size (multiple of `align`, <= max_tile) and the padded dim it divides."""
    if dim >= max_tile:
        return max_tile, _round_up(dim, max_tile)
    p = _round_up(dim, align)
    return p, p


# ----------------------- Pallas kernel 1: tiled matmul (+LeakyReLU) -----------------------
def _matmul_act_kernel(a_ref, w_ref, o_ref, acc_ref, *, apply_leaky):
    k = pl.program_id(2)

    @pl.when(k == 0)
    def _():
        acc_ref[...] = jnp.zeros_like(acc_ref)

    acc_ref[...] += jnp.dot(a_ref[...], w_ref[...], preferred_element_type=jnp.float32)

    @pl.when(k == pl.num_programs(2) - 1)
    def _():
        y = acc_ref[...]  # f32 epilogue (VPU-friendly on v5e too)
        if apply_leaky:
            y = jnp.where(y > 0, y, NEG_SLOPE * y)
        o_ref[...] = y.astype(o_ref.dtype)


def pack_conv_weight(w_oihw):
    """Torch-layout (C_out, C_in, kh, kw) -> padded bf16 (Kp, Np) matmul weight, done once."""
    co, ci, kh, kw = w_oihw.shape
    # rows ordered (kh, kw, c_in) to match im2col_nhwc column order
    w_mat = jnp.transpose(w_oihw, (2, 3, 1, 0)).reshape(kh * kw * ci, co)
    K, N = w_mat.shape
    TK, Kp = _choose_tile(K, 512, 128)
    TN, Np = _choose_tile(N, 256, 128)
    w_p = jnp.pad(w_mat, ((0, Kp - K), (0, Np - N))).astype(jnp.bfloat16)
    return {"w": w_p, "K": K, "N": N, "TK": TK, "TN": TN}


def conv_matmul(patches, packed, apply_leaky):
    """patches: (M, K) f32 -> (M, N) f32 = patches @ W (+ optional fused LeakyReLU)."""
    M, K = patches.shape
    assert K == packed["K"], (K, packed["K"])
    Kp, Np = packed["w"].shape
    TK, TN = packed["TK"], packed["TN"]
    TM, Mp = _choose_tile(M, 512, 8)

    a = jnp.pad(patches.astype(jnp.bfloat16), ((0, Mp - M), (0, Kp - K)))

    grid = (Mp // TM, Np // TN, Kp // TK)
    out = pl.pallas_call(
        functools.partial(_matmul_act_kernel, apply_leaky=apply_leaky),
        out_shape=jax.ShapeDtypeStruct((Mp, Np), jnp.float32),
        grid_spec=pltpu.PrefetchScalarGridSpec(
            num_scalar_prefetch=0,
            grid=grid,
            in_specs=[
                pl.BlockSpec((TM, TK), lambda i, j, k: (i, k)),
                pl.BlockSpec((TK, TN), lambda i, j, k: (k, j)),
            ],
            out_specs=pl.BlockSpec((TM, TN), lambda i, j, k: (i, j)),
            scratch_shapes=[pltpu.VMEM((TM, TN), jnp.float32)],
        ),
        compiler_params=pltpu.CompilerParams(
            dimension_semantics=("parallel", "parallel", "arbitrary"),
            vmem_limit_bytes=VMEM_LIMIT_BYTES,
        ),
    )(a, packed["w"])
    return out[:M, : packed["N"]]


# ------------------- Pallas kernel 2: fused InstanceNorm2d + LeakyReLU --------------------
def _inorm_lrelu_kernel(x_ref, o_ref, *, eps):
    x = x_ref[...]  # (1, HW, C) f32 — one batch element
    inv_n = 1.0 / x.shape[1]
    mean = jnp.sum(x, axis=1, keepdims=True) * inv_n
    var = jnp.sum(x * x, axis=1, keepdims=True) * inv_n - mean * mean  # biased, as torch
    y = (x - mean) * lax.rsqrt(var + eps)
    o_ref[...] = jnp.where(y > 0, y, NEG_SLOPE * y)


def instance_norm_lrelu(x):
    """x: (B, HW, C) f32 -> per-(b, c) normalization over HW, then LeakyReLU(0.2)."""
    B, HW, C = x.shape
    return pl.pallas_call(
        functools.partial(_inorm_lrelu_kernel, eps=IN_EPS),
        out_shape=jax.ShapeDtypeStruct((B, HW, C), jnp.float32),
        grid_spec=pltpu.PrefetchScalarGridSpec(
            num_scalar_prefetch=0,
            grid=(B,),
            in_specs=[pl.BlockSpec((1, HW, C), lambda b: (b, 0, 0))],
            out_specs=pl.BlockSpec((1, HW, C), lambda b: (b, 0, 0)),
        ),
        compiler_params=pltpu.CompilerParams(
            dimension_semantics=("parallel",),
            vmem_limit_bytes=VMEM_LIMIT_BYTES,
        ),
    )(x)


# ------------------------------- JAX glue (im2col, NHWC) ----------------------------------
def im2col_nhwc(x, k, s, p):
    """x: (B, H, W, C) -> (B*Ho*Wo, k*k*C), column order (kh, kw, c)."""
    B, H, W, C = x.shape
    xp = jnp.pad(x, ((0, 0), (p, p), (p, p), (0, 0))) if p > 0 else x
    Ho = (H + 2 * p - k) // s + 1
    Wo = (W + 2 * p - k) // s + 1
    cols = []
    for kh in range(k):
        for kw in range(k):
            cols.append(
                xp[:, kh : kh + s * (Ho - 1) + 1 : s, kw : kw + s * (Wo - 1) + 1 : s, :]
            )  # (B, Ho, Wo, C)
    patches = jnp.concatenate(cols, axis=-1)  # (B, Ho, Wo, k*k*C)
    return patches.reshape(B * Ho * Wo, k * k * C), Ho, Wo


def init_params(key, nc, ndf):
    """Returns (raw f32 OIHW weights for the reference, packed padded bf16 weights for Pallas)."""
    raw, packed = {}, {}
    shapes = [(ndf, nc), (ndf * 2, ndf), (ndf * 4, ndf * 2), (1, ndf * 4)]
    for i, (co, ci) in enumerate(shapes):
        key, kw = jax.random.split(key)
        w = 0.05 * jax.random.normal(kw, (co, ci, 4, 4), jnp.float32)
        raw[f"conv{i}"] = w
        packed[f"conv{i}"] = pack_conv_weight(w)
    return raw, packed


def discriminator_forward(x_nchw, packed):
    """x: (B, nc, H, W) NCHW -> validity (B, 1).  Activations kept NHWC internally."""
    B = x_nchw.shape[0]
    y = jnp.transpose(x_nchw.astype(jnp.float32), (0, 2, 3, 1))  # single NCHW->NHWC

    # block 1: conv + LeakyReLU (fused in matmul epilogue)
    patches, Ho, Wo = im2col_nhwc(y, 4, 2, 1)
    out = conv_matmul(patches, packed["conv0"], apply_leaky=True)
    y = out.reshape(B, Ho, Wo, -1)

    # blocks 2 & 3: conv + InstanceNorm2d + LeakyReLU
    for name in ("conv1", "conv2"):
        patches, Ho, Wo = im2col_nhwc(y, 4, 2, 1)
        out = conv_matmul(patches, packed[name], apply_leaky=False)
        out = instance_norm_lrelu(out.reshape(B, Ho * Wo, -1))
        y = out.reshape(B, Ho, Wo, -1)

    # last layer: Conv2d(4ndf, 1, k=4, s=1, p=0), then view(B, -1)
    patches, Ho, Wo = im2col_nhwc(y, 4, 1, 0)
    validity = conv_matmul(patches, packed["conv3"], apply_leaky=False)  # (B*Ho*Wo, 1)
    return validity.reshape(B, -1)


# --------------------------------- pure-JAX f32 reference ---------------------------------
def _instance_norm_ref(y, eps=IN_EPS):
    mean = y.mean(axis=(2, 3), keepdims=True)
    var = y.var(axis=(2, 3), keepdims=True)  # biased
    return (y - mean) / jnp.sqrt(var + eps)


def _conv_ref(y, w, stride, pad):
    return lax.conv_general_dilated(
        y, w, (stride, stride), ((pad, pad), (pad, pad)),
        dimension_numbers=("NCHW", "OIHW", "NCHW"),
    )


def reference_forward(x, raw):
    y = x.astype(jnp.float32)
    y = _conv_ref(y, raw["conv0"], 2, 1)
    y = jnp.where(y > 0, y, NEG_SLOPE * y)
    for name in ("conv1", "conv2"):
        y = _conv_ref(y, raw[name], 2, 1)
        y = _instance_norm_ref(y)
        y = jnp.where(y > 0, y, NEG_SLOPE * y)
    y = _conv_ref(y, raw["conv3"], 1, 0)
    return y.reshape(x.shape[0], -1)


# ------------------------------------------ main ------------------------------------------
if __name__ == "__main__":
    # Three stride-2 convs then a valid 4x4 conv require spatial >= 32; 32 -> 1x1 output.
    nc, ndf, batch, hw = 3, 8, 2, 32
    key = jax.random.PRNGKey(0)
    kx, kp = jax.random.split(key)
    x = jax.random.normal(kx, (batch, nc, hw, hw), jnp.float32)
    raw_params, packed_params = init_params(kp, nc, ndf)

    out = discriminator_forward(x, packed_params)
    out = jax.block_until_ready(out)
    assert out.shape == (batch, 1), out.shape

    ref = reference_forward(x, raw_params)
    err = float(jnp.max(jnp.abs(out - ref)))
    # bf16 MXU inputs with f32 accumulation across 4 chained layers => ~1e-2-level abs diff
    assert err < 5e-2, f"mismatch vs reference: {err}"

    print("KERNEL_OK")
</pallas_src>

<mosaic_0001>
module attributes {stable_mosaic.version = 11 : i64} {
  func.func @_matmul_act_kernel(%arg0: i32, %arg1: i32, %arg2: i32, %arg3: memref<512x128xbf16, #tpu.memory_space<vmem>>, %arg4: memref<128x128xbf16, #tpu.memory_space<vmem>>, %arg5: memref<512x128xf32, #tpu.memory_space<vmem>>, %arg6: memref<512x128xf32, #tpu.memory_space<vmem>>) attributes {dimension_semantics = [#tpu.dimension_semantics<parallel>, #tpu.dimension_semantics<parallel>, #tpu.dimension_semantics<arbitrary>], iteration_bounds = array<i64: 1, 1, 1>, scalar_prefetch = 0 : i64, scratch_operands = 1 : i64, tpu.core_type = #tpu.core_type<tc>, window_params = [{transform_indices = @transform_0, window_bounds = array<i64: 512, 128>}, {transform_indices = @transform_1, window_bounds = array<i64: 128, 128>}, {transform_indices = @transform_2, window_bounds = array<i64: 512, 128>}]} {
    %c0_i32 = arith.constant 0 : i32
    %0 = arith.cmpi eq, %arg2, %c0_i32 : i32
    %1 = arith.extui %0 : i1 to i32
    %c0_i32_0 = arith.constant 0 : i32
    %2 = arith.cmpi ne, %1, %c0_i32_0 : i32
    scf.if %2 {
      %cst_10 = arith.constant 0.000000e+00 : f32
      %12 = vector.broadcast %cst_10 : f32 to vector<512x128xf32>
      %c0_11 = arith.constant 0 : index
      %c0_12 = arith.constant 0 : index
      %13 = vector.load %arg6[%c0_11, %c0_12] : memref<512x128xf32, #tpu.memory_space<vmem>>, vector<512x128xf32>
      tpu.vector_store %arg6[%c0_11, %c0_12], %12 {strides = array<i32>} : memref<512x128xf32, #tpu.memory_space<vmem>>, vector<512x128xf32>,
    } else {
    }
    %c0 = arith.constant 0 : index
    %c0_1 = arith.constant 0 : index
    %3 = vector.load %arg6[%c0, %c0_1] : memref<512x128xf32, #tpu.memory_space<vmem>>, vector<512x128xf32>
    %c0_2 = arith.constant 0 : index
    %c0_3 = arith.constant 0 : index
    %4 = vector.load %arg3[%c0_2, %c0_3] : memref<512x128xbf16, #tpu.memory_space<vmem>>, vector<512x128xbf16>
    %c0_4 = arith.constant 0 : index
    %c0_5 = arith.constant 0 : index
    %5 = vector.load %arg4[%c0_4, %c0_5] : memref<128x128xbf16, #tpu.memory_space<vmem>>, vector<128x128xbf16>
    %cst = arith.constant dense<0.000000e+00> : vector<512x128xf32>
    %6 = tpu.matmul %4, %5, %cst {dimension_numbers = #tpu.dot_dimension_numbers<[1], [0], [0], [1], [0, 0, 1, 1], [], []>} : vector<512x128xbf16>, vector<128x128xbf16>, vector<512x128xf32> -> vector<512x128xf32>
    %7 = arith.addf %3, %6 : vector<512x128xf32>
    %c0_6 = arith.constant 0 : index
    %c0_7 = arith.constant 0 : index
    %8 = vector.load %arg6[%c0_6, %c0_7] : memref<512x128xf32, #tpu.memory_space<vmem>>, vector<512x128xf32>
    tpu.vector_store %arg6[%c0_6, %c0_7], %7 {strides = array<i32>} : memref<512x128xf32, #tpu.memory_space<vmem>>, vector<512x128xf32>,
    %c0_i32_8 = arith.constant 0 : i32
    %9 = arith.cmpi eq, %arg2, %c0_i32_8 : i32
    %10 = arith.extui %9 : i1 to i32
    %c0_i32_9 = arith.constant 0 : i32
    %11 = arith.cmpi ne, %10, %c0_i32_9 : i32
    scf.if %11 {
      %c0_10 = arith.constant 0 : index
      %c0_11 = arith.constant 0 : index
      %12 = vector.load %arg6[%c0_10, %c0_11] : memref<512x128xf32, #tpu.memory_space<vmem>>, vector<512x128xf32>
      %cst_12 = arith.constant 0.000000e+00 : f32
      %13 = vector.broadcast %cst_12 : f32 to vector<512x128xf32>
      %14 = arith.cmpf ogt, %12, %13 : vector<512x128xf32>
      %cst_13 = arith.constant 2.000000e-01 : f32
      %15 = vector.broadcast %cst_13 : f32 to vector<512x128xf32>
      %16 = arith.mulf %15, %12 : vector<512x128xf32>
      %17 = arith.select %14, %12, %16 : vector<512x128xi1>, vector<512x128xf32>
      %c0_14 = arith.constant 0 : index
      %c0_15 = arith.constant 0 : index
      %18 = vector.load %arg5[%c0_14, %c0_15] : memref<512x128xf32, #tpu.memory_space<vmem>>, vector<512x128xf32>
      tpu.vector_store %arg5[%c0_14, %c0_15], %17 {strides = array<i32>} : memref<512x128xf32, #tpu.memory_space<vmem>>, vector<512x128xf32>,
    } else {
    }
    return
  }
  func.func @transform_0(%arg0: i32, %arg1: i32, %arg2: i32) -> (i32, i32) {
    %c0_i32 = arith.constant 0 : i32
    return %arg0, %arg2 : i32, i32
  }
  func.func @transform_1(%arg0: i32, %arg1: i32, %arg2: i32) -> (i32, i32) {
    %c0_i32 = arith.constant 0 : i32
    return %arg2, %arg1 : i32, i32
  }
  func.func @transform_2(%arg0: i32, %arg1: i32, %arg2: i32) -> (i32, i32) {
    %c0_i32 = arith.constant 0 : i32
    return %arg0, %arg1 : i32, i32
  }
}

</mosaic_0001>

<llo_original>
// kernel: tpu_custom_call.1
$region0: #{tpu_custom_call.1}
  #allocation0 [shape = 'u32[]', space=smem, size = 0x4, offset = 0x4, fixed_abs, tag = 'smem constant byte address 0x4 - core index']
  #allocation1 [shape = 'u32[72,128]{1,0:T(1,128)}', space=vmem, size = 0x9000, scoped, tag = 'internal scratch']
  #allocation2 [shape = 'f32[512,128]{1,0:T(8,128)}', space=vmem, size = 0x40000, scoped, tag = 'scratch operand']
  %s0 = inlined_call_operand.hbm [shape: bf16[512,128], index: 0, kind: input, shape index: {}]
  %s1 = inlined_call_operand.hbm [shape: bf16[128,128], index: 1, kind: input, shape index: {}]
  %s2 = inlined_call_operand.hbm [shape: f32[512,128], index: 2, kind: output, shape index: {}]
  %s3 = sld [smem:[#allocation0]]
  $region34: #{tpu_custom_call.1} parent=0
    _
  %s5 = ssub.s32 1, %s3
  %s6 = scalar_select 0, %s5, %s3
  $region1: #{tpu_custom_call.1} parent=0
    #allocation3 [shape = 'u8[131072]{0}', space=vmem, size = 0x20000, scoped, tag = 'input window, operand 0, single buffered']
    #allocation4 [shape = 's32[1]{0}', space=sflag, size = 0x4, scoped, tag = 'scoped memory for tpu_custom_call.1']
    #allocation5 [shape = 's32[1]{0}', space=sflag, size = 0x4, scoped, tag = 'scoped memory for tpu_custom_call.1']
    #allocation6 [shape = 'u8[32768]{0}', space=vmem, size = 0x8000, scoped, tag = 'input window, operand 1, single buffered']
    #allocation7 [shape = 's32[1]{0}', space=sflag, size = 0x4, scoped, tag = 'scoped memory for tpu_custom_call.1']
    #allocation8 [shape = 'u8[262144]{0}', space=vmem, size = 0x40000, scoped, tag = 'output window, operand 0, single buffered']
    %7 = vsyncpa [#allocation4], 0
    %8 = vsyncpa [#allocation7], 0
    %9 = vsyncpa [#allocation5], 0
    // Predicated region
    $region2: #{tpu_custom_call.1} parent=1 // pred_check
      _
    $region3: #{tpu_custom_call.1} parent=1 // pred_check_branch
      %11 = sbr.rel (0) target = $region5
    $region4: #{tpu_custom_call.1} parent=1 // pred_region
      %13 = vsyncadd [#allocation4], 0
      %s14 = sshll.u32 %s0, 4
      %s15 = int_to_ptr.hbm [resolvable:$true] %s14
      %s16 = sshll.u32 [#allocation3], 4
      %s17 = int_to_ptr.vmem [resolvable:$true] %s16
      %22 = dma.hbm_to_vmem [thread:$0]  %s15, 4096, %s17, [#allocation4], 64, 64, 4
    $region5: #{tpu_custom_call.1} parent=1 // pred_fallthru
      _
    // Predicated region
    $region6: #{tpu_custom_call.1} parent=1 // pred_check
      _
    $region7: #{tpu_custom_call.1} parent=1 // pred_check_branch
      %24 = sbr.rel (0) target = $region9
    $region8: #{tpu_custom_call.1} parent=1 // pred_region
      %26 = vsyncadd [#allocation7], 0
      %s27 = sshll.u32 %s1, 4
      %s28 = int_to_ptr.hbm [resolvable:$true] %s27
      %s29 = sshll.u32 [#allocation6], 4
      %s30 = int_to_ptr.vmem [resolvable:$true] %s29
      %35 = dma.hbm_to_vmem [thread:$0]  %s28, 1024, %s30, [#allocation7], 64, 64, 4
    $region9: #{tpu_custom_call.1} parent=1 // pred_fallthru
      _
    // Predicated region
    $region10: #{tpu_custom_call.1} parent=1 // pred_check
      _
    $region11: #{tpu_custom_call.1} parent=1 // pred_check_branch
      %37 = sbr.rel (0) target = $region13
    $region12: #{tpu_custom_call.1} parent=1 // pred_region
      %39 = dma.done [#allocation4], 4096
    $region13: #{tpu_custom_call.1} parent=1 // pred_fallthru
      _
    // Predicated region
    $region14: #{tpu_custom_call.1} parent=1 // pred_check
      _
    $region15: #{tpu_custom_call.1} parent=1 // pred_check_branch
      %41 = sbr.rel (0) target = $region17
    $region16: #{tpu_custom_call.1} parent=1 // pred_region
      %43 = dma.done [#allocation7], 1024
    $region17: #{tpu_custom_call.1} parent=1 // pred_fallthru
      _
    %p44 = scmp.eq.s32.totalorder 0, 0
    // Predicated region
    $region18: #{tpu_custom_call.1} parent=1 // pred_check
      %p45 = pneg %p44
    $region19: #{tpu_custom_call.1} parent=1 // pred_check_branch
      %47 = sbr.rel (%p45) target = $region21
    $region20: #{tpu_custom_call.1} parent=1 // pred_region
      %48 = vst [vmem:[#allocation2] sm:$0xff] 0.0
      %49 = vst [vmem:[#allocation2 + $0x8] sm:$0xff] 0.0
      %50 = vst [vmem:[#allocation2 + $0x10] sm:$0xff] 0.0
      %51 = vst [vmem:[#allocation2 + $0x18] sm:$0xff] 0.0
      %52 = vst [vmem:[#allocation2 + $0x20] sm:$0xff] 0.0
      %53 = vst [vmem:[#allocation2 + $0x28] sm:$0xff] 0.0
      %54 = vst [vmem:[#allocation2 + $0x30] sm:$0xff] 0.0
      %55 = vst [vmem:[#allocation2 + $0x38] sm:$0xff] 0.0
      %56 = vst [vmem:[#allocation2 + $0x40] sm:$0xff] 0.0
      %57 = vst [vmem:[#allocation2 + $0x48] sm:$0xff] 0.0
      %58 = vst [vmem:[#allocation2 + $0x50] sm:$0xff] 0.0
      %59 = vst [vmem:[#allocation2 + $0x58] sm:$0xff] 0.0
      %60 = vst [vmem:[#allocation2 + $0x60] sm:$0xff] 0.0
      %61 = vst [vmem:[#allocation2 + $0x68] sm:$0xff] 0.0
      %62 = vst [vmem:[#allocation2 + $0x70] sm:$0xff] 0.0
      %63 = vst [vmem:[#allocation2 + $0x78] sm:$0xff] 0.0
      %64 = vst [vmem:[#allocation2 + $0x80] sm:$0xff] 0.0
      %65 = vst [vmem:[#allocation2 + $0x88] sm:$0xff] 0.0
      %66 = vst [vmem:[#allocation2 + $0x90] sm:$0xff] 0.0
      %67 = vst [vmem:[#allocation2 + $0x98] sm:$0xff] 0.0
      %68 = vst [vmem:[#allocation2 + $0xa0] sm:$0xff] 0.0
      %69 = vst [vmem:[#allocation2 + $0xa8] sm:$0xff] 0.0
      %70 = vst [vmem:[#allocation2 + $0xb0] sm:$0xff] 0.0
      %71 = vst [vmem:[#allocation2 + $0xb8] sm:$0xff] 0.0
      %72 = vst [vmem:[#allocation2 + $0xc0] sm:$0xff] 0.0
      %73 = vst [vmem:[#allocation2 + $0xc8] sm:$0xff] 0.0
      %74 = vst [vmem:[#allocation2 + $0xd0] sm:$0xff] 0.0
      %75 = vst [vmem:[#allocation2 + $0xd8] sm:$0xff] 0.0
      %76 = vst [vmem:[#allocation2 + $0xe0] sm:$0xff] 0.0
      %77 = vst [vmem:[#allocation2 + $0xe8] sm:$0xff] 0.0
      %78 = vst [vmem:[#allocation2 + $0xf0] sm:$0xff] 0.0
      %79 = vst [vmem:[#allocation2 + $0xf8] sm:$0xff] 0.0
      %80 = vst [vmem:[#allocation2 + $0x100] sm:$0xff] 0.0
      %81 = vst [vmem:[#allocation2 + $0x108] sm:$0xff] 0.0
      %82 = vst [vmem:[#allocation2 + $0x110] sm:$0xff] 0.0
      %83 = vst [vmem:[#allocation2 + $0x118] sm:$0xff] 0.0
      %84 = vst [vmem:[#allocation2 + $0x120] sm:$0xff] 0.0
      %85 = vst [vmem:[#allocation2 + $0x128] sm:$0xff] 0.0
      %86 = vst [vmem:[#allocation2 + $0x130] sm:$0xff] 0.0
      %87 = vst [vmem:[#allocation2 + $0x138] sm:$0xff] 0.0
      %88 = vst [vmem:[#allocation2 + $0x140] sm:$0xff] 0.0
      %89 = vst [vmem:[#allocation2 + $0x148] sm:$0xff] 0.0
      %90 = vst [vmem:[#allocation2 + $0x150] sm:$0xff] 0.0
      %91 = vst [vmem:[#allocation2 + $0x158] sm:$0xff] 0.0
      %92 = vst [vmem:[#allocation2 + $0x160] sm:$0xff] 0.0
      %93 = vst [vmem:[#allocation2 + $0x168] sm:$0xff] 0.0
      %94 = vst [vmem:[#allocation2 + $0x170] sm:$0xff] 0.0
      %95 = vst [vmem:[#allocation2 + $0x178] sm:$0xff] 0.0
      %96 = vst [vmem:[#allocation2 + $0x180] sm:$0xff] 0.0
      %97 = vst [vmem:[#allocation2 + $0x188] sm:$0xff] 0.0
      %98 = vst [vmem:[#allocation2 + $0x190] sm:$0xff] 0.0
      %99 = vst [vmem:[#allocation2 + $0x198] sm:$0xff] 0.0
      %100 = vst [vmem:[#allocation2 + $0x1a0] sm:$0xff] 0.0
      %101 = vst [vmem:[#allocation2 + $0x1a8] sm:$0xff] 0.0
      %102 = vst [vmem:[#allocation2 + $0x1b0] sm:$0xff] 0.0
      %103 = vst [vmem:[#allocation2 + $0x1b8] sm:$0xff] 0.0
      %104 = vst [vmem:[#allocation2 + $0x1c0] sm:$0xff] 0.0
      %105 = vst [vmem:[#allocation2 + $0x1c8] sm:$0xff] 0.0
      %106 = vst [vmem:[#allocation2 + $0x1d0] sm:$0xff] 0.0
      %107 = vst [vmem:[#allocation2 + $0x1d8] sm:$0xff] 0.0
      %108 = vst [vmem:[#allocation2 + $0x1e0] sm:$0xff] 0.0
      %109 = vst [vmem:[#allocation2 + $0x1e8] sm:$0xff] 0.0
      %110 = vst [vmem:[#allocation2 + $0x1f0] sm:$0xff] 0.0
      %111 = vst [vmem:[#allocation2 + $0x1f8] sm:$0xff] 0.0
    $region21: #{tpu_custom_call.1} parent=1 // pred_fallthru
      _
    %v112 = vld [vmem:[#allocation2] sm:$0xff]
    %v113 = vld [vmem:[#allocation2 + $0x8] sm:$0xff]
    %v114 = vld [vmem:[#allocation2 + $0x10] sm:$0xff]
    %v115 = vld [vmem:[#allocation2 + $0x18] sm:$0xff]
    %v116 = vld [vmem:[#allocation2 + $0x20] sm:$0xff]
    %v117 = vld [vmem:[#allocation2 + $0x28] sm:$0xff]
    %v118 = vld [vmem:[#allocation2 + $0x30] sm:$0xff]
    %v119 = vld [vmem:[#allocation2 + $0x38] sm:$0xff]
    %v120 = vld [vmem:[#allocation2 + $0x40] sm:$0xff]
    %v121 = vld [vmem:[#allocation2 + $0x48] sm:$0xff]
    %v122 = vld [vmem:[#allocation2 + $0x50] sm:$0xff]
    %v123 = vld [vmem:[#allocation2 + $0x58] sm:$0xff]
    %v124 = vld [vmem:[#allocation2 + $0x60] sm:$0xff]
    %v125 = vld [vmem:[#allocation2 + $0x68] sm:$0xff]
    %v126 = vld [vmem:[#allocation2 + $0x70] sm:$0xff]
    %v127 = vld [vmem:[#allocation2 + $0x78] sm:$0xff]
    %v128 = vld [vmem:[#allocation2 + $0x80] sm:$0xff]
    %v129 = vld [vmem:[#allocation2 + $0x88] sm:$0xff]
    %v130 = vld [vmem:[#allocation2 + $0x90] sm:$0xff]
    %v131 = vld [vmem:[#allocation2 + $0x98] sm:$0xff]
    %v132 = vld [vmem:[#allocation2 + $0xa0] sm:$0xff]
    %v133 = vld [vmem:[#allocation2 + $0xa8] sm:$0xff]
    %v134 = vld [vmem:[#allocation2 + $0xb0] sm:$0xff]
    %v135 = vld [vmem:[#allocation2 + $0xb8] sm:$0xff]
    %v136 = vld [vmem:[#allocation2 + $0xc0] sm:$0xff]
    %v137 = vld [vmem:[#allocation2 + $0xc8] sm:$0xff]
    %v138 = vld [vmem:[#allocation2 + $0xd0] sm:$0xff]
    %v139 = vld [vmem:[#allocation2 + $0xd8] sm:$0xff]
    %v140 = vld [vmem:[#allocation2 + $0xe0] sm:$0xff]
    %v141 = vld [vmem:[#allocation2 + $0xe8] sm:$0xff]
    %v142 = vld [vmem:[#allocation2 + $0xf0] sm:$0xff]
    %v143 = vld [vmem:[#allocation2 + $0xf8] sm:$0xff]
    %v144 = vld [vmem:[#allocation2 + $0x100] sm:$0xff]
    %v145 = vld [vmem:[#allocation2 + $0x108] sm:$0xff]
    %v146 = vld [vmem:[#allocation2 + $0x110] sm:$0xff]
    %v147 = vld [vmem:[#allocation2 + $0x118] sm:$0xff]
    %v148 = vld [vmem:[#allocation2 + $0x120] sm:$0xff]
    %v149 = vld [vmem:[#allocation2 + $0x128] sm:$0xff]
    %v150 = vld [vmem:[#allocation2 + $0x130] sm:$0xff]
    %v151 = vld [vmem:[#allocation2 + $0x138] sm:$0xff]
    %v152 = vld [vmem:[#allocation2 + $0x140] sm:$0xff]
    %v153 = vld [vmem:[#allocation2 + $0x148] sm:$0xff]
    %v154 = vld [vmem:[#allocation2 + $0x150] sm:$0xff]
    %v155 = vld [vmem:[#allocation2 + $0x158] sm:$0xff]
    %v156 = vld [vmem:[#allocation2 + $0x160] sm:$0xff]
    %v157 = vld [vmem:[#allocation2 + $0x168] sm:$0xff]
    %v158 = vld [vmem:[#allocation2 + $0x170] sm:$0xff]
    %v159 = vld [vmem:[#allocation2 + $0x178] sm:$0xff]
    %v160 = vld [vmem:[#allocation2 + $0x180] sm:$0xff]
    %v161 = vld [vmem:[#allocation2 + $0x188] sm:$0xff]
    %v162 = vld [vmem:[#allocation2 + $0x190] sm:$0xff]
    %v163 = vld [vmem:[#allocation2 + $0x198] sm:$0xff]
    %v164 = vld [vmem:[#allocation2 + $0x1a0] sm:$0xff]
    %v165 = vld [vmem:[#allocation2 + $0x1a8] sm:$0xff]
    %v166 = vld [vmem:[#allocation2 + $0x1b0] sm:$0xff]
    %v167 = vld [vmem:[#allocation2 + $0x1b8] sm:$0xff]
    %v168 = vld [vmem:[#allocation2 + $0x1c0] sm:$0xff]
    %v169 = vld [vmem:[#allocation2 + $0x1c8] sm:$0xff]
    %v170 = vld [vmem:[#allocation2 + $0x1d0] sm:$0xff]
    %v171 = vld [vmem:[#allocation2 + $0x1d8] sm:$0xff]
    %v172 = vld [vmem:[#allocation2 + $0x1e0] sm:$0xff]
    %v173 = vld [vmem:[#allocation2 + $0x1e8] sm:$0xff]
    %v174 = vld [vmem:[#allocation2 + $0x1f0] sm:$0xff]
    %v175 = vld [vmem:[#allocation2 + $0x1f8] sm:$0xff]
    %v176 = vld [vmem:[#allocation3] sm:$0xf]
    %v177 = vld [vmem:[#allocation3 + $0x4] sm:$0xf]
    %v178 = vld [vmem:[#allocation3 + $0x8] sm:$0xf]
    %v179 = vld [vmem:[#allocation3 + $0xc] sm:$0xf]
    %v180 = vld [vmem:[#allocation3 + $0x10] sm:$0xf]
    %v181 = vld [vmem:[#allocation3 + $0x14] sm:$0xf]
    %v182 = vld [vmem:[#allocation3 + $0x18] sm:$0xf]
    %v183 = vld [vmem:[#allocation3 + $0x1c] sm:$0xf]
    %v184 = vld [vmem:[#allocation3 + $0x20] sm:$0xf]
    %v185 = vld [vmem:[#allocation3 + $0x24] sm:$0xf]
    %v186 = vld [vmem:[#allocation3 + $0x28] sm:$0xf]
    %v187 = vld [vmem:[#allocation3 + $0x2c] sm:$0xf]
    %v188 = vld [vmem:[#allocation3 + $0x30] sm:$0xf]
    %v189 = vld [vmem:[#allocation3 + $0x34] sm:$0xf]
    %v190 = vld [vmem:[#allocation3 + $0x38] sm:$0xf]
    %v191 = vld [vmem:[#allocation3 + $0x3c] sm:$0xf]
    %v192 = vld [vmem:[#allocation3 + $0x40] sm:$0xf]
    %v193 = vld [vmem:[#allocation3 + $0x44] sm:$0xf]
    %v194 = vld [vmem:[#allocation3 + $0x48] sm:$0xf]
    %v195 = vld [vmem:[#allocation3 + $0x4c] sm:$0xf]
    %v196 = vld [vmem:[#allocation3 + $0x50] sm:$0xf]
    %v197 = vld [vmem:[#allocation3 + $0x54] sm:$0xf]
    %v198 = vld [vmem:[#allocation3 + $0x58] sm:$0xf]
    %v199 = vld [vmem:[#allocation3 + $0x5c] sm:$0xf]
    %v200 = vld [vmem:[#allocation3 + $0x60] sm:$0xf]
    %v201 = vld [vmem:[#allocation3 + $0x64] sm:$0xf]
    %v202 = vld [vmem:[#allocation3 + $0x68] sm:$0xf]
    %v203 = vld [vmem:[#allocation3 + $0x6c] sm:$0xf]
    %v204 = vld [vmem:[#allocation3 + $0x70] sm:$0xf]
    %v205 = vld [vmem:[#allocation3 + $0x74] sm:$0xf]
    %v206 = vld [vmem:[#allocation3 + $0x78] sm:$0xf]
    %v207 = vld [vmem:[#allocation3 + $0x7c] sm:$0xf]
    %v208 = vld [vmem:[#allocation3 + $0x80] sm:$0xf]
    %v209 = vld [vmem:[#allocation3 + $0x84] sm:$0xf]
    %v210 = vld [vmem:[#allocation3 + $0x88] sm:$0xf]
    %v211 = vld [vmem:[#allocation3 + $0x8c] sm:$0xf]
    %v212 = vld [vmem:[#allocation3 + $0x90] sm:$0xf]
    %v213 = vld [vmem:[#allocation3 + $0x94] sm:$0xf]
    %v214 = vld [vmem:[#allocation3 + $0x98] sm:$0xf]
    %v215 = vld [vmem:[#allocation3 + $0x9c] sm:$0xf]
    %v216 = vld [vmem:[#allocation3 + $0xa0] sm:$0xf]
    %v217 = vld [vmem:[#allocation3 + $0xa4] sm:$0xf]
    %v218 = vld [vmem:[#allocation3 + $0xa8] sm:$0xf]
    %v219 = vld [vmem:[#allocation3 + $0xac] sm:$0xf]
    %v220 = vld [vmem:[#allocation3 + $0xb0] sm:$0xf]
    %v221 = vld [vmem:[#allocation3 + $0xb4] sm:$0xf]
    %v222 = vld [vmem:[#allocation3 + $0xb8] sm:$0xf]
    %v223 = vld [vmem:[#allocation3 + $0xbc] sm:$0xf]
    %v224 = vld [vmem:[#allocation3 + $0xc0] sm:$0xf]
    %v225 = vld [vmem:[#allocation3 + $0xc4] sm:$0xf]
    %v226 = vld [vmem:[#allocation3 + $0xc8] sm:$0xf]
    %v227 = vld [vmem:[#allocation3 + $0xcc] sm:$0xf]
    %v228 = vld [vmem:[#allocation3 + $0xd0] sm:$0xf]
    %v229 = vld [vmem:[#allocation3 + $0xd4] sm:$0xf]
    %v230 = vld [vmem:[#allocation3 + $0xd8] sm:$0xf]
    %v231 = vld [vmem:[#allocation3 + $0xdc] sm:$0xf]
    %v232 = vld [vmem:[#allocation3 + $0xe0] sm:$0xf]
    %v233 = vld [vmem:[#allocation3 + $0xe4] sm:$0xf]
    %v234 = vld [vmem:[#allocation3 + $0xe8] sm:$0xf]
    %v235 = vld [vmem:[#allocation3 + $0xec] sm:$0xf]
    %v236 = vld [vmem:[#allocation3 + $0xf0] sm:$0xf]
    %v237 = vld [vmem:[#allocation3 + $0xf4] sm:$0xf]
    %v238 = vld [vmem:[#allocation3 + $0xf8] sm:$0xf]
    %v239 = vld [vmem:[#allocation3 + $0xfc] sm:$0xf]
    %v240 = vld [vmem:[#allocation6] sm:$0xf]
    %v241 = vld [vmem:[#allocation6 + $0x4] sm:$0xf]
    %v242 = vld [vmem:[#allocation6 + $0x8] sm:$0xf]
    %v243 = vld [vmem:[#allocation6 + $0xc] sm:$0xf]
    %v244 = vld [vmem:[#allocation6 + $0x10] sm:$0xf]
    %v245 = vld [vmem:[#allocation6 + $0x14] sm:$0xf]
    %v246 = vld [vmem:[#allocation6 + $0x18] sm:$0xf]
    %v247 = vld [vmem:[#allocation6 + $0x1c] sm:$0xf]
    %v248 = vld [vmem:[#allocation6 + $0x20] sm:$0xf]
    %v249 = vld [vmem:[#allocation6 + $0x24] sm:$0xf]
    %v250 = vld [vmem:[#allocation6 + $0x28] sm:$0xf]
    %v251 = vld [vmem:[#allocation6 + $0x2c] sm:$0xf]
    %v252 = vld [vmem:[#allocation6 + $0x30] sm:$0xf]
    %v253 = vld [vmem:[#allocation6 + $0x34] sm:$0xf]
    %v254 = vld [vmem:[#allocation6 + $0x38] sm:$0xf]
    %v255 = vld [vmem:[#allocation6 + $0x3c] sm:$0xf]
    %v320 = vunpack.c.l.b16 %v176
    %v321 = vunpack.c.l.b16 %v177
    %v322 = vunpack.c.l.b16 %v178
    %v323 = vunpack.c.l.b16 %v179
    %v324 = vunpack.c.l.b16 %v180
    %v325 = vunpack.c.l.b16 %v181
    %v326 = vunpack.c.l.b16 %v182
    %v327 = vunpack.c.l.b16 %v183
    %v328 = vunpack.c.l.b16 %v184
    %v329 = vunpack.c.l.b16 %v185
    %v330 = vunpack.c.l.b16 %v186
    %v331 = vunpack.c.l.b16 %v187
    %v332 = vunpack.c.l.b16 %v188
    %v333 = vunpack.c.l.b16 %v189
    %v334 = vunpack.c.l.b16 %v190
    %v335 = vunpack.c.l.b16 %v191
    %v336 = vunpack.c.l.b16 %v192
    %v337 = vunpack.c.l.b16 %v193
    %v338 = vunpack.c.l.b16 %v194
    %v339 = vunpack.c.l.b16 %v195
    %v340 = vunpack.c.l.b16 %v196
    %v341 = vunpack.c.l.b16 %v197
    %v342 = vunpack.c.l.b16 %v198
    %v343 = vunpack.c.l.b16 %v199
    %v344 = vunpack.c.l.b16 %v200
    %v345 = vunpack.c.l.b16 %v201
    %v346 = vunpack.c.l.b16 %v202
    %v347 = vunpack.c.l.b16 %v203
    %v348 = vunpack.c.l.b16 %v204
    %v349 = vunpack.c.l.b16 %v205
    %v350 = vunpack.c.l.b16 %v206
    %v351 = vunpack.c.l.b16 %v207
    %v352 = vunpack.c.l.b16 %v208
    %v353 = vunpack.c.l.b16 %v209
    %v354 = vunpack.c.l.b16 %v210
    %v355 = vunpack.c.l.b16 %v211
    %v356 = vunpack.c.l.b16 %v212
    %v357 = vunpack.c.l.b16 %v213
    %v358 = vunpack.c.l.b16 %v214
    %v359 = vunpack.c.l.b16 %v215
    %v360 = vunpack.c.l.b16 %v216
    %v361 = vunpack.c.l.b16 %v217
    %v362 = vunpack.c.l.b16 %v218
    %v363 = vunpack.c.l.b16 %v219
    %v364 = vunpack.c.l.b16 %v220
    %v365 = vunpack.c.l.b16 %v221
    %v366 = vunpack.c.l.b16 %v222
    %v367 = vunpack.c.l.b16 %v223
    %v368 = vunpack.c.l.b16 %v224
    %v369 = vunpack.c.l.b16 %v225
    %v370 = vunpack.c.l.b16 %v226
    %v371 = vunpack.c.l.b16 %v227
    %v372 = vunpack.c.l.b16 %v228
    %v373 = vunpack.c.l.b16 %v229
    %v374 = vunpack.c.l.b16 %v230
    %v375 = vunpack.c.l.b16 %v231
    %v376 = vunpack.c.l.b16 %v232
    %v377 = vunpack.c.l.b16 %v233
    %v378 = vunpack.c.l.b16 %v234
    %v379 = vunpack.c.l.b16 %v235
    %v380 = vunpack.c.l.b16 %v236
    %v381 = vunpack.c.l.b16 %v237
    %v382 = vunpack.c.l.b16 %v238
    %v383 = vunpack.c.l.b16 %v239
    %v384 = vpack.c.b16 %v321, %v320
    %v385 = vpack.c.b16 %v323, %v322
    %v386 = vpack.c.b16 %v325, %v324
    %v387 = vpack.c.b16 %v327, %v326
    %v388 = vpack.c.b16 %v329, %v328
    %v389 = vpack.c.b16 %v331, %v330
    %v390 = vpack.c.b16 %v333, %v332
    %v391 = vpack.c.b16 %v335, %v334
    %v392 = vpack.c.b16 %v337, %v336
    %v393 = vpack.c.b16 %v339, %v338
    %v394 = vpack.c.b16 %v341, %v340
    %v395 = vpack.c.b16 %v343, %v342
    %v396 = vpack.c.b16 %v345, %v344
    %v397 = vpack.c.b16 %v347, %v346
    %v398 = vpack.c.b16 %v349, %v348
    %v399 = vpack.c.b16 %v351, %v350
    %v400 = vpack.c.b16 %v353, %v352
    %v401 = vpack.c.b16 %v355, %v354
    %v402 = vpack.c.b16 %v357, %v356
    %v403 = vpack.c.b16 %v359, %v358
    %v404 = vpack.c.b16 %v361, %v360
    %v405 = vpack.c.b16 %v363, %v362
    %v406 = vpack.c.b16 %v365, %v364
    %v407 = vpack.c.b16 %v367, %v366
    %v408 = vpack.c.b16 %v369, %v368
    %v409 = vpack.c.b16 %v371, %v370
    %v410 = vpack.c.b16 %v373, %v372
    %v411 = vpack.c.b16 %v375, %v374
    %v412 = vpack.c.b16 %v377, %v376
    %v413 = vpack.c.b16 %v379, %v378
    %v414 = vpack.c.b16 %v381, %v380
    %v415 = vpack.c.b16 %v383, %v382
    %v464 = vunpack.c.l.b16 %v240
    %v465 = vunpack.c.l.b16 %v241
    %v466 = vunpack.c.l.b16 %v242
    %v467 = vunpack.c.l.b16 %v243
    %v468 = vunpack.c.l.b16 %v244
    %v469 = vunpack.c.l.b16 %v245
    %v470 = vunpack.c.l.b16 %v246
    %v471 = vunpack.c.l.b16 %v247
    %v472 = vunpack.c.l.b16 %v248
    %v473 = vunpack.c.l.b16 %v249
    %v474 = vunpack.c.l.b16 %v250
    %v475 = vunpack.c.l.b16 %v251
    %v476 = vunpack.c.l.b16 %v252
    %v477 = vunpack.c.l.b16 %v253
    %v478 = vunpack.c.l.b16 %v254
    %v479 = vunpack.c.l.b16 %v255
    %v480 = vpack.c.b16 %v465, %v464
    %v481 = vpack.c.b16 %v467, %v466
    %v482 = vpack.c.b16 %v469, %v468
    %v483 = vpack.c.b16 %v471, %v470
    %v484 = vpack.c.b16 %v473, %v472
    %v485 = vpack.c.b16 %v475, %v474
    %v486 = vpack.c.b16 %v477, %v476
    %v487 = vpack.c.b16 %v479, %v478
    %496 = vmatpush.bf16.msra.mxu0 %v487
    %497 = vmatpush.bf16.msra.mxu0 %v486
    %498 = vmatpush.bf16.msra.mxu0 %v485
    %499 = vmatpush.bf16.msra.mxu0 %v484
    %500 = vmatpush.bf16.msra.mxu0 %v483
    %501 = vmatpush.bf16.msra.mxu0 %v482
    %502 = vmatpush.bf16.msra.mxu0 %v481
    %503 = vmatpush.bf16.msra.mxu0 %v480
    %504 = vmatmul.bf16.gmra.mxu0 %v384
    %v505 = vpop.f32.mrf.mxu0
    %v506 = vadd.f32 0.0, %v505
    %v507 = vpop.f32.mrf.mxu0
    %v508 = vadd.f32 0.0, %v507
    %509 = vmatmul.bf16.gmra.mxu0 %v385
    %v510 = vpop.f32.mrf.mxu0
    %v511 = vadd.f32 0.0, %v510
    %v512 = vpop.f32.mrf.mxu0
    %v513 = vadd.f32 0.0, %v512
    %514 = vmatmul.bf16.gmra.mxu0 %v386
    %v515 = vpop.f32.mrf.mxu0
    %v516 = vadd.f32 0.0, %v515
    %v517 = vpop.f32.mrf.mxu0
    %v518 = vadd.f32 0.0, %v517
    %519 = vmatmul.bf16.gmra.mxu0 %v387
    %v520 = vpop.f32.mrf.mxu0
    %v521 = vadd.f32 0.0, %v520
    %v522 = vpop.f32.mrf.mxu0
    %v523 = vadd.f32 0.0, %v522
    %524 = vmatmul.bf16.gmra.mxu0 %v388
    %v525 = vpop.f32.mrf.mxu0
    %v526 = vadd.f32 0.0, %v525
    %v527 = vpop.f32.mrf.mxu0
    %v528 = vadd.f32 0.0, %v527
    %529 = vmatmul.bf16.gmra.mxu0 %v389
    %v530 = vpop.f32.mrf.mxu0
    %v531 = vadd.f32 0.0, %v530
    %v532 = vpop.f32.mrf.mxu0
    %v533 = vadd.f32 0.0, %v532
    %534 = vmatmul.bf16.gmra.mxu0 %v390
    %v535 = vpop.f32.mrf.mxu0
    %v536 = vadd.f32 0.0, %v535
    %v537 = vpop.f32.mrf.mxu0
    %v538 = vadd.f32 0.0, %v537
    %539 = vmatmul.bf16.gmra.mxu0 %v391
    %v540 = vpop.f32.mrf.mxu0
    %v541 = vadd.f32 0.0, %v540
    %v542 = vpop.f32.mrf.mxu0
    %v543 = vadd.f32 0.0, %v542
    %544 = vmatmul.bf16.gmra.mxu0 %v392
    %v545 = vpop.f32.mrf.mxu0
    %v546 = vadd.f32 0.0, %v545
    %v547 = vpop.f32.mrf.mxu0
    %v548 = vadd.f32 0.0, %v547
    %549 = vmatmul.bf16.gmra.mxu0 %v393
    %v550 = vpop.f32.mrf.mxu0
    %v551 = vadd.f32 0.0, %v550
    %v552 = vpop.f32.mrf.mxu0
    %v553 = vadd.f32 0.0, %v552
    %554 = vmatmul.bf16.gmra.mxu0 %v394
    %v555 = vpop.f32.mrf.mxu0
    %v556 = vadd.f32 0.0, %v555
    %v557 = vpop.f32.mrf.mxu0
    %v558 = vadd.f32 0.0, %v557
    %559 = vmatmul.bf16.gmra.mxu0 %v395
    %v560 = vpop.f32.mrf.mxu0
    %v561 = vadd.f32 0.0, %v560
    %v562 = vpop.f32.mrf.mxu0
    %v563 = vadd.f32 0.0, %v562
    %564 = vmatmul.bf16.gmra.mxu0 %v396
    %v565 = vpop.f32.mrf.mxu0
    %v566 = vadd.f32 0.0, %v565
    %v567 = vpop.f32.mrf.mxu0
    %v568 = vadd.f32 0.0, %v567
    %569 = vmatmul.bf16.gmra.mxu0 %v397
    %v570 = vpop.f32.mrf.mxu0
    %v571 = vadd.f32 0.0, %v570
    %v572 = vpop.f32.mrf.mxu0
    %v573 = vadd.f32 0.0, %v572
    %574 = vmatmul.bf16.gmra.mxu0 %v398
    %v575 = vpop.f32.mrf.mxu0
    %v576 = vadd.f32 0.0, %v575
    %v577 = vpop.f32.mrf.mxu0
    %v578 = vadd.f32 0.0, %v577
    %579 = vmatmul.bf16.gmra.mxu0 %v399
    %v580 = vpop.f32.mrf.mxu0
    %v581 = vadd.f32 0.0, %v580
    %v582 = vpop.f32.mrf.mxu0
    %v583 = vadd.f32 0.0, %v582
    %584 = vmatmul.bf16.gmra.mxu0 %v400
    %v585 = vpop.f32.mrf.mxu0
    %v586 = vadd.f32 0.0, %v585
    %v587 = vpop.f32.mrf.mxu0
    %v588 = vadd.f32 0.0, %v587
    %589 = vmatmul.bf16.gmra.mxu0 %v401
    %v590 = vpop.f32.mrf.mxu0
    %v591 = vadd.f32 0.0, %v590
    %v592 = vpop.f32.mrf.mxu0
    %v593 = vadd.f32 0.0, %v592
    %594 = vmatmul.bf16.gmra.mxu0 %v402
    %v595 = vpop.f32.mrf.mxu0
    %v596 = vadd.f32 0.0, %v595
    %v597 = vpop.f32.mrf.mxu0
    %v598 = vadd.f32 0.0, %v597
    %599 = vmatmul.bf16.gmra.mxu0 %v403
    %v600 = vpop.f32.mrf.mxu0
    %v601 = vadd.f32 0.0, %v600
    %v602 = vpop.f32.mrf.mxu0
    %v603 = vadd.f32 0.0, %v602
    %604 = vmatmul.bf16.gmra.mxu0 %v404
    %v605 = vpop.f32.mrf.mxu0
    %v606 = vadd.f32 0.0, %v605
    %v607 = vpop.f32.mrf.mxu0
    %v608 = vadd.f32 0.0, %v607
    %609 = vmatmul.bf16.gmra.mxu0 %v405
    %v610 = vpop.f32.mrf.mxu0
    %v611 = vadd.f32 0.0, %v610
    %v612 = vpop.f32.mrf.mxu0
    %v613 = vadd.f32 0.0, %v612
    %614 = vmatmul.bf16.gmra.mxu0 %v406
    %v615 = vpop.f32.mrf.mxu0
    %v616 = vadd.f32 0.0, %v615
    %v617 = vpop.f32.mrf.mxu0
    %v618 = vadd.f32 0.0, %v617
    %619 = vmatmul.bf16.gmra.mxu0 %v407
    %v620 = vpop.f32.mrf.mxu0
    %v621 = vadd.f32 0.0, %v620
    %v622 = vpop.f32.mrf.mxu0
    %v623 = vadd.f32 0.0, %v622
    %624 = vmatmul.bf16.gmra.mxu0 %v408
    %v625 = vpop.f32.mrf.mxu0
    %v626 = vadd.f32 0.0, %v625
    %v627 = vpop.f32.mrf.mxu0
    %v628 = vadd.f32 0.0, %v627
    %629 = vmatmul.bf16.gmra.mxu0 %v409
    %v630 = vpop.f32.mrf.mxu0
    %v631 = vadd.f32 0.0, %v630
    %v632 = vpop.f32.mrf.mxu0
    %v633 = vadd.f32 0.0, %v632
    %634 = vmatmul.bf16.gmra.mxu0 %v410
    %v635 = vpop.f32.mrf.mxu0
    %v636 = vadd.f32 0.0, %v635
    %v637 = vpop.f32.mrf.mxu0
    %v638 = vadd.f32 0.0, %v637
    %639 = vmatmul.bf16.gmra.mxu0 %v411
    %v640 = vpop.f32.mrf.mxu0
    %v641 = vadd.f32 0.0, %v640
    %v642 = vpop.f32.mrf.mxu0
    %v643 = vadd.f32 0.0, %v642
    %644 = vmatmul.bf16.gmra.mxu0 %v412
    %v645 = vpop.f32.mrf.mxu0
    %v646 = vadd.f32 0.0, %v645
    %v647 = vpop.f32.mrf.mxu0
    %v648 = vadd.f32 0.0, %v647
    %649 = vmatmul.bf16.gmra.mxu0 %v413
    %v650 = vpop.f32.mrf.mxu0
    %v651 = vadd.f32 0.0, %v650
    %v652 = vpop.f32.mrf.mxu0
    %v653 = vadd.f32 0.0, %v652
    %654 = vmatmul.bf16.gmra.mxu0 %v414
    %v655 = vpop.f32.mrf.mxu0
    %v656 = vadd.f32 0.0, %v655
    %v657 = vpop.f32.mrf.mxu0
    %v658 = vadd.f32 0.0, %v657
    %659 = vmatmul.bf16.gmra.mxu0 %v415
    %v660 = vpop.f32.mrf.mxu0
    %v661 = vadd.f32 0.0, %v660
    %v662 = vpop.f32.mrf.mxu0
    %v663 = vadd.f32 0.0, %v662
    %664 = vdwg.mxu0
    %v665 = vadd.f32 %v112, %v506
    %v666 = vadd.f32 %v113, %v508
    %v667 = vadd.f32 %v114, %v511
    %v668 = vadd.f32 %v115, %v513
    %v669 = vadd.f32 %v116, %v516
    %v670 = vadd.f32 %v117, %v518
    %v671 = vadd.f32 %v118, %v521
    %v672 = vadd.f32 %v119, %v523
    %v673 = vadd.f32 %v120, %v526
    %v674 = vadd.f32 %v121, %v528
    %v675 = vadd.f32 %v122, %v531
    %v676 = vadd.f32 %v123, %v533
    %v677 = vadd.f32 %v124, %v536
    %v678 = vadd.f32 %v125, %v538
    %v679 = vadd.f32 %v126, %v541
    %v680 = vadd.f32 %v127, %v543
    %v681 = vadd.f32 %v128, %v546
    %v682 = vadd.f32 %v129, %v548
    %v683 = vadd.f32 %v130, %v551
    %v684 = vadd.f32 %v131, %v553
    %v685 = vadd.f32 %v132, %v556
    %v686 = vadd.f32 %v133, %v558
    %v687 = vadd.f32 %v134, %v561
    %v688 = vadd.f32 %v135, %v563
    %v689 = vadd.f32 %v136, %v566
    %v690 = vadd.f32 %v137, %v568
    %v691 = vadd.f32 %v138, %v571
    %v692 = vadd.f32 %v139, %v573
    %v693 = vadd.f32 %v140, %v576
    %v694 = vadd.f32 %v141, %v578
    %v695 = vadd.f32 %v142, %v581
    %v696 = vadd.f32 %v143, %v583
    %v697 = vadd.f32 %v144, %v586
    %v698 = vadd.f32 %v145, %v588
    %v699 = vadd.f32 %v146, %v591
    %v700 = vadd.f32 %v147, %v593
    %v701 = vadd.f32 %v148, %v596
    %v702 = vadd.f32 %v149, %v598
    %v703 = vadd.f32 %v150, %v601
    %v704 = vadd.f32 %v151, %v603
    %v705 = vadd.f32 %v152, %v606
    %v706 = vadd.f32 %v153, %v608
    %v707 = vadd.f32 %v154, %v611
    %v708 = vadd.f32 %v155, %v613
    %v709 = vadd.f32 %v156, %v616
    %v710 = vadd.f32 %v157, %v618
    %v711 = vadd.f32 %v158, %v621
    %v712 = vadd.f32 %v159, %v623
    %v713 = vadd.f32 %v160, %v626
    %v714 = vadd.f32 %v161, %v628
    %v715 = vadd.f32 %v162, %v631
    %v716 = vadd.f32 %v163, %v633
    %v717 = vadd.f32 %v164, %v636
    %v718 = vadd.f32 %v165, %v638
    %v719 = vadd.f32 %v166, %v641
    %v720 = vadd.f32 %v167, %v643
    %v721 = vadd.f32 %v168, %v646
    %v722 = vadd.f32 %v169, %v648
    %v723 = vadd.f32 %v170, %v651
    %v724 = vadd.f32 %v171, %v653
    %v725 = vadd.f32 %v172, %v656
    %v726 = vadd.f32 %v173, %v658
    %v727 = vadd.f32 %v174, %v661
    %v728 = vadd.f32 %v175, %v663
    %729 = vst [vmem:[#allocation2] sm:$0xff] %v665
    %730 = vst [vmem:[#allocation2 + $0x8] sm:$0xff] %v666
    %731 = vst [vmem:[#allocation2 + $0x10] sm:$0xff] %v667
    %732 = vst [vmem:[#allocation2 + $0x18] sm:$0xff] %v668
    %733 = vst [vmem:[#allocation2 + $0x20] sm:$0xff] %v669
    %734 = vst [vmem:[#allocation2 + $0x28] sm:$0xff] %v670
    %735 = vst [vmem:[#allocation2 + $0x30] sm:$0xff] %v671
    %736 = vst [vmem:[#allocation2 + $0x38] sm:$0xff] %v672
    %737 = vst [vmem:[#allocation2 + $0x40] sm:$0xff] %v673
    %738 = vst [vmem:[#allocation2 + $0x48] sm:$0xff] %v674
    %739 = vst [vmem:[#allocation2 + $0x50] sm:$0xff] %v675
    %740 = vst [vmem:[#allocation2 + $0x58] sm:$0xff] %v676
    %741 = vst [vmem:[#allocation2 + $0x60] sm:$0xff] %v677
    %742 = vst [vmem:[#allocation2 + $0x68] sm:$0xff] %v678
    %743 = vst [vmem:[#allocation2 + $0x70] sm:$0xff] %v679
    %744 = vst [vmem:[#allocation2 + $0x78] sm:$0xff] %v680
    %745 = vst [vmem:[#allocation2 + $0x80] sm:$0xff] %v681
    %746 = vst [vmem:[#allocation2 + $0x88] sm:$0xff] %v682
    %747 = vst [vmem:[#allocation2 + $0x90] sm:$0xff] %v683
    %748 = vst [vmem:[#allocation2 + $0x98] sm:$0xff] %v684
    %749 = vst [vmem:[#allocation2 + $0xa0] sm:$0xff] %v685
    %750 = vst [vmem:[#allocation2 + $0xa8] sm:$0xff] %v686
    %751 = vst [vmem:[#allocation2 + $0xb0] sm:$0xff] %v687
    %752 = vst [vmem:[#allocation2 + $0xb8] sm:$0xff] %v688
    %753 = vst [vmem:[#allocation2 + $0xc0] sm:$0xff] %v689
    %754 = vst [vmem:[#allocation2 + $0xc8] sm:$0xff] %v690
    %755 = vst [vmem:[#allocation2 + $0xd0] sm:$0xff] %v691
    %756 = vst [vmem:[#allocation2 + $0xd8] sm:$0xff] %v692
    %757 = vst [vmem:[#allocation2 + $0xe0] sm:$0xff] %v693
    %758 = vst [vmem:[#allocation2 + $0xe8] sm:$0xff] %v694
    %759 = vst [vmem:[#allocation2 + $0xf0] sm:$0xff] %v695
    %760 = vst [vmem:[#allocation2 + $0xf8] sm:$0xff] %v696
    %761 = vst [vmem:[#allocation2 + $0x100] sm:$0xff] %v697
    %762 = vst [vmem:[#allocation2 + $0x108] sm:$0xff] %v698
    %763 = vst [vmem:[#allocation2 + $0x110] sm:$0xff] %v699
    %764 = vst [vmem:[#allocation2 + $0x118] sm:$0xff] %v700
    %765 = vst [vmem:[#allocation2 + $0x120] sm:$0xff] %v701
    %766 = vst [vmem:[#allocation2 + $0x128] sm:$0xff] %v702
    %767 = vst [vmem:[#allocation2 + $0x130] sm:$0xff] %v703
    %768 = vst [vmem:[#allocation2 + $0x138] sm:$0xff] %v704
    %769 = vst [vmem:[#allocation2 + $0x140] sm:$0xff] %v705
    %770 = vst [vmem:[#allocation2 + $0x148] sm:$0xff] %v706
    %771 = vst [vmem:[#allocation2 + $0x150] sm:$0xff] %v707
    %772 = vst [vmem:[#allocation2 + $0x158] sm:$0xff] %v708
    %773 = vst [vmem:[#allocation2 + $0x160] sm:$0xff] %v709
    %774 = vst [vmem:[#allocation2 + $0x168] sm:$0xff] %v710
    %775 = vst [vmem:[#allocation2 + $0x170] sm:$0xff] %v711
    %776 = vst [vmem:[#allocation2 + $0x178] sm:$0xff] %v712
    %777 = vst [vmem:[#allocation2 + $0x180] sm:$0xff] %v713
    %778 = vst [vmem:[#allocation2 + $0x188] sm:$0xff] %v714
    %779 = vst [vmem:[#allocation2 + $0x190] sm:$0xff] %v715
    %780 = vst [vmem:[#allocation2 + $0x198] sm:$0xff] %v716
    %781 = vst [vmem:[#allocation2 + $0x1a0] sm:$0xff] %v717
    %782 = vst [vmem:[#allocation2 + $0x1a8] sm:$0xff] %v718
    %783 = vst [vmem:[#allocation2 + $0x1b0] sm:$0xff] %v719
    %784 = vst [vmem:[#allocation2 + $0x1b8] sm:$0xff] %v720
    %785 = vst [vmem:[#allocation2 + $0x1c0] sm:$0xff] %v721
    %786 = vst [vmem:[#allocation2 + $0x1c8] sm:$0xff] %v722
    %787 = vst [vmem:[#allocation2 + $0x1d0] sm:$0xff] %v723
    %788 = vst [vmem:[#allocation2 + $0x1d8] sm:$0xff] %v724
    %789 = vst [vmem:[#allocation2 + $0x1e0] sm:$0xff] %v725
    %790 = vst [vmem:[#allocation2 + $0x1e8] sm:$0xff] %v726
    %791 = vst [vmem:[#allocation2 + $0x1f0] sm:$0xff] %v727
    %792 = vst [vmem:[#allocation2 + $0x1f8] sm:$0xff] %v728
    // Predicated region
    $region22: #{tpu_custom_call.1} parent=1 // pred_check
      %p793 = pneg %p44
    $region23: #{tpu_custom_call.1} parent=1 // pred_check_branch
      %795 = sbr.rel (%p793) target = $region25
    $region24: #{tpu_custom_call.1} parent=1 // pred_region
      %v796 = vld [vmem:[#allocation2] sm:$0xff]
      %v797 = vld [vmem:[#allocation2 + $0x8] sm:$0xff]
      %v798 = vld [vmem:[#allocation2 + $0x10] sm:$0xff]
      %v799 = vld [vmem:[#allocation2 + $0x18] sm:$0xff]
      %v800 = vld [vmem:[#allocation2 + $0x20] sm:$0xff]
      %v801 = vld [vmem:[#allocation2 + $0x28] sm:$0xff]
      %v802 = vld [vmem:[#allocation2 + $0x30] sm:$0xff]
      %v803 = vld [vmem:[#allocation2 + $0x38] sm:$0xff]
      %v804 = vld [vmem:[#allocation2 + $0x40] sm:$0xff]
      %v805 = vld [vmem:[#allocation2 + $0x48] sm:$0xff]
      %v806 = vld [vmem:[#allocation2 + $0x50] sm:$0xff]
      %v807 = vld [vmem:[#allocation2 + $0x58] sm:$0xff]
      %v808 = vld [vmem:[#allocation2 + $0x60] sm:$0xff]
      %v809 = vld [vmem:[#allocation2 + $0x68] sm:$0xff]
      %v810 = vld [vmem:[#allocation2 + $0x70] sm:$0xff]
      %v811 = vld [vmem:[#allocation2 + $0x78] sm:$0xff]
      %v812 = vld [vmem:[#allocation2 + $0x80] sm:$0xff]
      %v813 = vld [vmem:[#allocation2 + $0x88] sm:$0xff]
      %v814 = vld [vmem:[#allocation2 + $0x90] sm:$0xff]
      %v815 = vld [vmem:[#allocation2 + $0x98] sm:$0xff]
      %v816 = vld [vmem:[#allocation2 + $0xa0] sm:$0xff]
      %v817 = vld [vmem:[#allocation2 + $0xa8] sm:$0xff]
      %v818 = vld [vmem:[#allocation2 + $0xb0] sm:$0xff]
      %v819 = vld [vmem:[#allocation2 + $0xb8] sm:$0xff]
      %v820 = vld [vmem:[#allocation2 + $0xc0] sm:$0xff]
      %v821 = vld [vmem:[#allocation2 + $0xc8] sm:$0xff]
      %v822 = vld [vmem:[#allocation2 + $0xd0] sm:$0xff]
      %v823 = vld [vmem:[#allocation2 + $0xd8] sm:$0xff]
      %v824 = vld [vmem:[#allocation2 + $0xe0] sm:$0xff]
      %v825 = vld [vmem:[#allocation2 + $0xe8] sm:$0xff]
      %v826 = vld [vmem:[#allocation2 + $0xf0] sm:$0xff]
      %v827 = vld [vmem:[#allocation2 + $0xf8] sm:$0xff]
      %v828 = vld [vmem:[#allocation2 + $0x100] sm:$0xff]
      %v829 = vld [vmem:[#allocation2 + $0x108] sm:$0xff]
      %v830 = vld [vmem:[#allocation2 + $0x110] sm:$0xff]
      %v831 = vld [vmem:[#allocation2 + $0x118] sm:$0xff]
      %v832 = vld [vmem:[#allocation2 + $0x120] sm:$0xff]
      %v833 = vld [vmem:[#allocation2 + $0x128] sm:$0xff]
      %v834 = vld [vmem:[#allocation2 + $0x130] sm:$0xff]
      %v835 = vld [vmem:[#allocation2 + $0x138] sm:$0xff]
      %v836 = vld [vmem:[#allocation2 + $0x140] sm:$0xff]
      %v837 = vld [vmem:[#allocation2 + $0x148] sm:$0xff]
      %v838 = vld [vmem:[#allocation2 + $0x150] sm:$0xff]
      %v839 = vld [vmem:[#allocation2 + $0x158] sm:$0xff]
      %v840 = vld [vmem:[#allocation2 + $0x160] sm:$0xff]
      %v841 = vld [vmem:[#allocation2 + $0x168] sm:$0xff]
      %v842 = vld [vmem:[#allocation2 + $0x170] sm:$0xff]
      %v843 = vld [vmem:[#allocation2 + $0x178] sm:$0xff]
      %v844 = vld [vmem:[#allocation2 + $0x180] sm:$0xff]
      %v845 = vld [vmem:[#allocation2 + $0x188] sm:$0xff]
      %v846 = vld [vmem:[#allocation2 + $0x190] sm:$0xff]
      %v847 = vld [vmem:[#allocation2 + $0x198] sm:$0xff]
      %v848 = vld [vmem:[#allocation2 + $0x1a0] sm:$0xff]
      %v849 = vld [vmem:[#allocation2 + $0x1a8] sm:$0xff]
      %v850 = vld [vmem:[#allocation2 + $0x1b0] sm:$0xff]
      %v851 = vld [vmem:[#allocation2 + $0x1b8] sm:$0xff]
      %v852 = vld [vmem:[#allocation2 + $0x1c0] sm:$0xff]
      %v853 = vld [vmem:[#allocation2 + $0x1c8] sm:$0xff]
      %v854 = vld [vmem:[#allocation2 + $0x1d0] sm:$0xff]
      %v855 = vld [vmem:[#allocation2 + $0x1d8] sm:$0xff]
      %v856 = vld [vmem:[#allocation2 + $0x1e0] sm:$0xff]
      %v857 = vld [vmem:[#allocation2 + $0x1e8] sm:$0xff]
      %v858 = vld [vmem:[#allocation2 + $0x1f0] sm:$0xff]
      %v859 = vld [vmem:[#allocation2 + $0x1f8] sm:$0xff]
      %vm860 = vcmp.gt.f32.partialorder %v796, 0.0
      %vm861 = vcmp.gt.f32.partialorder %v797, 0.0
      %vm862 = vcmp.gt.f32.partialorder %v798, 0.0
      %vm863 = vcmp.gt.f32.partialorder %v799, 0.0
      %vm864 = vcmp.gt.f32.partialorder %v800, 0.0
      %vm865 = vcmp.gt.f32.partialorder %v801, 0.0
      %vm866 = vcmp.gt.f32.partialorder %v802, 0.0
      %vm867 = vcmp.gt.f32.partialorder %v803, 0.0
      %vm868 = vcmp.gt.f32.partialorder %v804, 0.0
      %vm869 = vcmp.gt.f32.partialorder %v805, 0.0
      %vm870 = vcmp.gt.f32.partialorder %v806, 0.0
      %vm871 = vcmp.gt.f32.partialorder %v807, 0.0
      %vm872 = vcmp.gt.f32.partialorder %v808, 0.0
      %vm873 = vcmp.gt.f32.partialorder %v809, 0.0
      %vm874 = vcmp.gt.f32.partialorder %v810, 0.0
      %vm875 = vcmp.gt.f32.partialorder %v811, 0.0
      %vm876 = vcmp.gt.f32.partialorder %v812, 0.0
      %vm877 = vcmp.gt.f32.partialorder %v813, 0.0
      %vm878 = vcmp.gt.f32.partialorder %v814, 0.0
      %vm879 = vcmp.gt.f32.partialorder %v815, 0.0
      %vm880 = vcmp.gt.f32.partialorder %v816, 0.0
      %vm881 = vcmp.gt.f32.partialorder %v817, 0.0
      %vm882 = vcmp.gt.f32.partialorder %v818, 0.0
      %vm883 = vcmp.gt.f32.partialorder %v819, 0.0
      %vm884 = vcmp.gt.f32.partialorder %v820, 0.0
      %vm885 = vcmp.gt.f32.partialorder %v821, 0.0
      %vm886 = vcmp.gt.f32.partialorder %v822, 0.0
      %vm887 = vcmp.gt.f32.partialorder %v823, 0.0
      %vm888 = vcmp.gt.f32.partialorder %v824, 0.0
      %vm889 = vcmp.gt.f32.partialorder %v825, 0.0
      %vm890 = vcmp.gt.f32.partialorder %v826, 0.0
      %vm891 = vcmp.gt.f32.partialorder %v827, 0.0
      %vm892 = vcmp.gt.f32.partialorder %v828, 0.0
      %vm893 = vcmp.gt.f32.partialorder %v829, 0.0
      %vm894 = vcmp.gt.f32.partialorder %v830, 0.0
      %vm895 = vcmp.gt.f32.partialorder %v831, 0.0
      %vm896 = vcmp.gt.f32.partialorder %v832, 0.0
      %vm897 = vcmp.gt.f32.partialorder %v833, 0.0
      %vm898 = vcmp.gt.f32.partialorder %v834, 0.0
      %vm899 = vcmp.gt.f32.partialorder %v835, 0.0
      %vm900 = vcmp.gt.f32.partialorder %v836, 0.0
      %vm901 = vcmp.gt.f32.partialorder %v837, 0.0
      %vm902 = vcmp.gt.f32.partialorder %v838, 0.0
      %vm903 = vcmp.gt.f32.partialorder %v839, 0.0
      %vm904 = vcmp.gt.f32.partialorder %v840, 0.0
      %vm905 = vcmp.gt.f32.partialorder %v841, 0.0
      %vm906 = vcmp.gt.f32.partialorder %v842, 0.0
      %vm907 = vcmp.gt.f32.partialorder %v843, 0.0
      %vm908 = vcmp.gt.f32.partialorder %v844, 0.0
      %vm909 = vcmp.gt.f32.partialorder %v845, 0.0
      %vm910 = vcmp.gt.f32.partialorder %v846, 0.0
      %vm911 = vcmp.gt.f32.partialorder %v847, 0.0
      %vm912 = vcmp.gt.f32.partialorder %v848, 0.0
      %vm913 = vcmp.gt.f32.partialorder %v849, 0.0
      %vm914 = vcmp.gt.f32.partialorder %v850, 0.0
      %vm915 = vcmp.gt.f32.partialorder %v851, 0.0
      %vm916 = vcmp.gt.f32.partialorder %v852, 0.0
      %vm917 = vcmp.gt.f32.partialorder %v853, 0.0
      %vm918 = vcmp.gt.f32.partialorder %v854, 0.0
      %vm919 = vcmp.gt.f32.partialorder %v855, 0.0
      %vm920 = vcmp.gt.f32.partialorder %v856, 0.0
      %vm921 = vcmp.gt.f32.partialorder %v857, 0.0
      %vm922 = vcmp.gt.f32.partialorder %v858, 0.0
      %vm923 = vcmp.gt.f32.partialorder %v859, 0.0
      %v924 = vmul.f32 %v796, 0.2
      %v925 = vmul.f32 %v797, 0.2
      %v926 = vmul.f32 %v798, 0.2
      %v927 = vmul.f32 %v799, 0.2
      %v928 = vmul.f32 %v800, 0.2
      %v929 = vmul.f32 %v801, 0.2
      %v930 = vmul.f32 %v802, 0.2
      %v931 = vmul.f32 %v803, 0.2
      %v932 = vmul.f32 %v804, 0.2
      %v933 = vmul.f32 %v805, 0.2
      %v934 = vmul.f32 %v806, 0.2
      %v935 = vmul.f32 %v807, 0.2
      %v936 = vmul.f32 %v808, 0.2
      %v937 = vmul.f32 %v809, 0.2
      %v938 = vmul.f32 %v810, 0.2
      %v939 = vmul.f32 %v811, 0.2
      %v940 = vmul.f32 %v812, 0.2
      %v941 = vmul.f32 %v813, 0.2
      %v942 = vmul.f32 %v814, 0.2
      %v943 = vmul.f32 %v815, 0.2
      %v944 = vmul.f32 %v816, 0.2
      %v945 = vmul.f32 %v817, 0.2
      %v946 = vmul.f32 %v818, 0.2
      %v947 = vmul.f32 %v819, 0.2
      %v948 = vmul.f32 %v820, 0.2
      %v949 = vmul.f32 %v821, 0.2
      %v950 = vmul.f32 %v822, 0.2
      %v951 = vmul.f32 %v823, 0.2
      %v952 = vmul.f32 %v824, 0.2
      %v953 = vmul.f32 %v825, 0.2
      %v954 = vmul.f32 %v826, 0.2
      %v955 = vmul.f32 %v827, 0.2
      %v956 = vmul.f32 %v828, 0.2
      %v957 = vmul.f32 %v829, 0.2
      %v958 = vmul.f32 %v830, 0.2
      %v959 = vmul.f32 %v831, 0.2
      %v960 = vmul.f32 %v832, 0.2
      %v961 = vmul.f32 %v833, 0.2
      %v962 = vmul.f32 %v834, 0.2
      %v963 = vmul.f32 %v835, 0.2
      %v964 = vmul.f32 %v836, 0.2
      %v965 = vmul.f32 %v837, 0.2
      %v966 = vmul.f32 %v838, 0.2
      %v967 = vmul.f32 %v839, 0.2
      %v968 = vmul.f32 %v840, 0.2
      %v969 = vmul.f32 %v841, 0.2
      %v970 = vmul.f32 %v842, 0.2
      %v971 = vmul.f32 %v843, 0.2
      %v972 = vmul.f32 %v844, 0.2
      %v973 = vmul.f32 %v845, 0.2
      %v974 = vmul.f32 %v846, 0.2
      %v975 = vmul.f32 %v847, 0.2
      %v976 = vmul.f32 %v848, 0.2
      %v977 = vmul.f32 %v849, 0.2
      %v978 = vmul.f32 %v850, 0.2
      %v979 = vmul.f32 %v851, 0.2
      %v980 = vmul.f32 %v852, 0.2
      %v981 = vmul.f32 %v853, 0.2
      %v982 = vmul.f32 %v854, 0.2
      %v983 = vmul.f32 %v855, 0.2
      %v984 = vmul.f32 %v856, 0.2
      %v985 = vmul.f32 %v857, 0.2
      %v986 = vmul.f32 %v858, 0.2
      %v987 = vmul.f32 %v859, 0.2
      %v988 = vsel %vm860, %v796, %v924
      %v989 = vsel %vm861, %v797, %v925
      %v990 = vsel %vm862, %v798, %v926
      %v991 = vsel %vm863, %v799, %v927
      %v992 = vsel %vm864, %v800, %v928
      %v993 = vsel %vm865, %v801, %v929
      %v994 = vsel %vm866, %v802, %v930
      %v995 = vsel %vm867, %v803, %v931
      %v996 = vsel %vm868, %v804, %v932
      %v997 = vsel %vm869, %v805, %v933
      %v998 = vsel %vm870, %v806, %v934
      %v999 = vsel %vm871, %v807, %v935
      %v1000 = vsel %vm872, %v808, %v936
      %v1001 = vsel %vm873, %v809, %v937
      %v1002 = vsel %vm874, %v810, %v938
      %v1003 = vsel %vm875, %v811, %v939
      %v1004 = vsel %vm876, %v812, %v940
      %v1005 = vsel %vm877, %v813, %v941
      %v1006 = vsel %vm878, %v814, %v942
      %v1007 = vsel %vm879, %v815, %v943
      %v1008 = vsel %vm880, %v816, %v944
      %v1009 = vsel %vm881, %v817, %v945
      %v1010 = vsel %vm882, %v818, %v946
      %v1011 = vsel %vm883, %v819, %v947
      %v1012 = vsel %vm884, %v820, %v948
      %v1013 = vsel %vm885, %v821, %v949
      %v1014 = vsel %vm886, %v822, %v950
      %v1015 = vsel %vm887, %v823, %v951
      %v1016 = vsel %vm888, %v824, %v952
      %v1017 = vsel %vm889, %v825, %v953
      %v1018 = vsel %vm890, %v826, %v954
      %v1019 = vsel %vm891, %v827, %v955
      %v1020 = vsel %vm892, %v828, %v956
      %v1021 = vsel %vm893, %v829, %v957
      %v1022 = vsel %vm894, %v830, %v958
      %v1023 = vsel %vm895, %v831, %v959
      %v1024 = vsel %vm896, %v832, %v960
      %v1025 = vsel %vm897, %v833, %v961
      %v1026 = vsel %vm898, %v834, %v962
      %v1027 = vsel %vm899, %v835, %v963
      %v1028 = vsel %vm900, %v836, %v964
      %v1029 = vsel %vm901, %v837, %v965
      %v1030 = vsel %vm902, %v838, %v966
      %v1031 = vsel %vm903, %v839, %v967
      %v1032 = vsel %vm904, %v840, %v968
      %v1033 = vsel %vm905, %v841, %v969
      %v1034 = vsel %vm906, %v842, %v970
      %v1035 = vsel %vm907, %v843, %v971
      %v1036 = vsel %vm908, %v844, %v972
      %v1037 = vsel %vm909, %v845, %v973
      %v1038 = vsel %vm910, %v846, %v974
      %v1039 = vsel %vm911, %v847, %v975
      %v1040 = vsel %vm912, %v848, %v976
      %v1041 = vsel %vm913, %v849, %v977
      %v1042 = vsel %vm914, %v850, %v978
      %v1043 = vsel %vm915, %v851, %v979
      %v1044 = vsel %vm916, %v852, %v980
      %v1045 = vsel %vm917, %v853, %v981
      %v1046 = vsel %vm918, %v854, %v982
      %v1047 = vsel %vm919, %v855, %v983
      %v1048 = vsel %vm920, %v856, %v984
      %v1049 = vsel %vm921, %v857, %v985
      %v1050 = vsel %vm922, %v858, %v986
      %v1051 = vsel %vm923, %v859, %v987
      %1052 = vst [vmem:[#allocation8] sm:$0xff] %v988
      %1053 = vst [vmem:[#allocation8 + $0x8] sm:$0xff] %v989
      %1054 = vst [vmem:[#allocation8 + $0x10] sm:$0xff] %v990
      %1055 = vst [vmem:[#allocation8 + $0x18] sm:$0xff] %v991
      %1056 = vst [vmem:[#allocation8 + $0x20] sm:$0xff] %v992
      %1057 = vst [vmem:[#allocation8 + $0x28] sm:$0xff] %v993
      %1058 = vst [vmem:[#allocation8 + $0x30] sm:$0xff] %v994
      %1059 = vst [vmem:[#allocation8 + $0x38] sm:$0xff] %v995
      %1060 = vst [vmem:[#allocation8 + $0x40] sm:$0xff] %v996
      %1061 = vst [vmem:[#allocation8 + $0x48] sm:$0xff] %v997
      %1062 = vst [vmem:[#allocation8 + $0x50] sm:$0xff] %v998
      %1063 = vst [vmem:[#allocation8 + $0x58] sm:$0xff] %v999
      %1064 = vst [vmem:[#allocation8 + $0x60] sm:$0xff] %v1000
      %1065 = vst [vmem:[#allocation8 + $0x68] sm:$0xff] %v1001
      %1066 = vst [vmem:[#allocation8 + $0x70] sm:$0xff] %v1002
      %1067 = vst [vmem:[#allocation8 + $0x78] sm:$0xff] %v1003
      %1068 = vst [vmem:[#allocation8 + $0x80] sm:$0xff] %v1004
      %1069 = vst [vmem:[#allocation8 + $0x88] sm:$0xff] %v1005
      %1070 = vst [vmem:[#allocation8 + $0x90] sm:$0xff] %v1006
      %1071 = vst [vmem:[#allocation8 + $0x98] sm:$0xff] %v1007
      %1072 = vst [vmem:[#allocation8 + $0xa0] sm:$0xff] %v1008
      %1073 = vst [vmem:[#allocation8 + $0xa8] sm:$0xff] %v1009
      %1074 = vst [vmem:[#allocation8 + $0xb0] sm:$0xff] %v1010
      %1075 = vst [vmem:[#allocation8 + $0xb8] sm:$0xff] %v1011
      %1076 = vst [vmem:[#allocation8 + $0xc0] sm:$0xff] %v1012
      %1077 = vst [vmem:[#allocation8 + $0xc8] sm:$0xff] %v1013
      %1078 = vst [vmem:[#allocation8 + $0xd0] sm:$0xff] %v1014
      %1079 = vst [vmem:[#allocation8 + $0xd8] sm:$0xff] %v1015
      %1080 = vst [vmem:[#allocation8 + $0xe0] sm:$0xff] %v1016
      %1081 = vst [vmem:[#allocation8 + $0xe8] sm:$0xff] %v1017
      %1082 = vst [vmem:[#allocation8 + $0xf0] sm:$0xff] %v1018
      %1083 = vst [vmem:[#allocation8 + $0xf8] sm:$0xff] %v1019
      %1084 = vst [vmem:[#allocation8 + $0x100] sm:$0xff] %v1020
      %1085 = vst [vmem:[#allocation8 + $0x108] sm:$0xff] %v1021
      %1086 = vst [vmem:[#allocation8 + $0x110] sm:$0xff] %v1022
      %1087 = vst [vmem:[#allocation8 + $0x118] sm:$0xff] %v1023
      %1088 = vst [vmem:[#allocation8 + $0x120] sm:$0xff] %v1024
      %1089 = vst [vmem:[#allocation8 + $0x128] sm:$0xff] %v1025
      %1090 = vst [vmem:[#allocation8 + $0x130] sm:$0xff] %v1026
      %1091 = vst [vmem:[#allocation8 + $0x138] sm:$0xff] %v1027
      %1092 = vst [vmem:[#allocation8 + $0x140] sm:$0xff] %v1028
      %1093 = vst [vmem:[#allocation8 + $0x148] sm:$0xff] %v1029
      %1094 = vst [vmem:[#allocation8 + $0x150] sm:$0xff] %v1030
      %1095 = vst [vmem:[#allocation8 + $0x158] sm:$0xff] %v1031
      %1096 = vst [vmem:[#allocation8 + $0x160] sm:$0xff] %v1032
      %1097 = vst [vmem:[#allocation8 + $0x168] sm:$0xff] %v1033
      %1098 = vst [vmem:[#allocation8 + $0x170] sm:$0xff] %v1034
      %1099 = vst [vmem:[#allocation8 + $0x178] sm:$0xff] %v1035
      %1100 = vst [vmem:[#allocation8 + $0x180] sm:$0xff] %v1036
      %1101 = vst [vmem:[#allocation8 + $0x188] sm:$0xff] %v1037
      %1102 = vst [vmem:[#allocation8 + $0x190] sm:$0xff] %v1038
      %1103 = vst [vmem:[#allocation8 + $0x198] sm:$0xff] %v1039
      %1104 = vst [vmem:[#allocation8 + $0x1a0] sm:$0xff] %v1040
      %1105 = vst [vmem:[#allocation8 + $0x1a8] sm:$0xff] %v1041
      %1106 = vst [vmem:[#allocation8 + $0x1b0] sm:$0xff] %v1042
      %1107 = vst [vmem:[#allocation8 + $0x1b8] sm:$0xff] %v1043
      %1108 = vst [vmem:[#allocation8 + $0x1c0] sm:$0xff] %v1044
      %1109 = vst [vmem:[#allocation8 + $0x1c8] sm:$0xff] %v1045
      %1110 = vst [vmem:[#allocation8 + $0x1d0] sm:$0xff] %v1046
      %1111 = vst [vmem:[#allocation8 + $0x1d8] sm:$0xff] %v1047
      %1112 = vst [vmem:[#allocation8 + $0x1e0] sm:$0xff] %v1048
      %1113 = vst [vmem:[#allocation8 + $0x1e8] sm:$0xff] %v1049
      %1114 = vst [vmem:[#allocation8 + $0x1f0] sm:$0xff] %v1050
      %1115 = vst [vmem:[#allocation8 + $0x1f8] sm:$0xff] %v1051
    $region25: #{tpu_custom_call.1} parent=1 // pred_fallthru
      _
    // Predicated region
    $region26: #{tpu_custom_call.1} parent=1 // pred_check
      _
    $region27: #{tpu_custom_call.1} parent=1 // pred_check_branch
      %1117 = sbr.rel (0) target = $region29
    $region28: #{tpu_custom_call.1} parent=1 // pred_region
      %1119 = vsyncadd [#allocation5], 0
      %s1120 = sshll.u32 [#allocation8], 4
      %s1121 = int_to_ptr.vmem [resolvable:$true] %s1120
      %s1122 = sshll.u32 %s2, 4
      %s1123 = int_to_ptr.hbm [resolvable:$true] %s1122
      %1128 = dma.vmem_to_hbm [thread:$0]  %s1121, 8192, %s1123, [#allocation5], 128, 128, 8
    $region29: #{tpu_custom_call.1} parent=1 // pred_fallthru
      _
    // Predicated region
    $region30: #{tpu_custom_call.1} parent=1 // pred_check
      _
    $region31: #{tpu_custom_call.1} parent=1 // pred_check_branch
      %1130 = sbr.rel (0) target = $region33
    $region32: #{tpu_custom_call.1} parent=1 // pred_region
      %1132 = dma.done [#allocation5], 8192
    $region33: #{tpu_custom_call.1} parent=1 // pred_fallthru
      _
    %1133 = vsyncpa [#allocation4], 1
    %1134 = vsyncpa [#allocation7], 1
    %1135 = vsyncpa [#allocation5], 1

</llo_original>
